<compile_context>
chip_gen: v7x
topology: tpu7x:2x2x1
jax: 0.10.0
libtpu: 0.0.40
codegen_flags: <defaults>
</compile_context>

<pallas_src>
import functools

import jax
import jax.numpy as jnp
from jax.experimental import pallas as pl
from jax.experimental.pallas import tpu as pltpu


def _round_up(n, m):
    return ((n + m - 1) // m) * m


def _mlp_kernel(x_ref,
                w0, b0, w1, b1, w2, b2, w3, b3, w4, b4, w5, b5,
                o_ref, *, activation, matmul_dtype):
    def layer(h, w_ref, b_ref):
        # MXU matmul in matmul_dtype, f32 accumulation; bias/activation in f32.
        y = jnp.dot(h, w_ref[...], preferred_element_type=jnp.float32) + b_ref[...]
        if activation == "relu":
            return jnp.maximum(y, 0.0)
        return jax.nn.sigmoid(y)

    h = x_ref[...]                                   # already matmul_dtype
    h = layer(h, w0, b0).astype(matmul_dtype)
    h = layer(h, w1, b1).astype(matmul_dtype)
    h = layer(h, w2, b2).astype(matmul_dtype)
    h = layer(h, w3, b3).astype(matmul_dtype)
    h = layer(h, w4, b4).astype(matmul_dtype)
    h = layer(h, w5, b5)                             # keep f32 for log_softmax

    # log_softmax over the feature axis (PyTorch dim=1), all in f32.
    m = jnp.max(h, axis=-1, keepdims=True)
    z = h - m
    lse = jnp.log(jnp.sum(jnp.exp(z), axis=-1, keepdims=True))
    o_ref[...] = (z - lse).astype(o_ref.dtype)


def model_type2_forward(x, params, model_letter, *,
                        batch_tile=512, matmul_dtype=jnp.bfloat16):
    """params: list of (W, b) with W shaped (in, out), b shaped (1, out)."""
    B, D = x.shape
    activation = "relu" if model_letter == "E" else "sigmoid"

    # Large tile to amortize grid-step overhead; cap at ~B/2 (rounded to a
    # sublane multiple) so the grid keeps >= 2 "parallel" steps for v7x's 2 TCs.
    half = _round_up(max(-(-B // 2), 8), 8)
    tile = max(8, min(batch_tile, half))
    B_pad = _round_up(B, tile)
    if B_pad != B:
        x = jnp.pad(x, ((0, B_pad - B), (0, 0)))

    x_in = x.astype(matmul_dtype) if x.dtype != matmul_dtype else x

    kernel = functools.partial(_mlp_kernel, activation=activation,
                               matmul_dtype=matmul_dtype)

    def full_spec(shape):
        # Constant block index -> Pallas fetches it once; no per-step DMA work.
        return pl.BlockSpec(shape, lambda i: (0, 0))

    in_specs = [pl.BlockSpec((tile, D), lambda i: (i, 0))]
    flat_params = []
    for (w, b) in params:
        w_in = w.astype(matmul_dtype) if w.dtype != matmul_dtype else w
        in_specs.append(full_spec(w.shape))
        in_specs.append(full_spec(b.shape))
        flat_params.extend([w_in, b.astype(jnp.float32)])

    out_dim = params[-1][0].shape[1]
    out_spec = pl.BlockSpec((tile, out_dim), lambda i: (i, 0))

    out = pl.pallas_call(
        kernel,
        out_shape=jax.ShapeDtypeStruct((B_pad, out_dim), jnp.float32),
        grid_spec=pltpu.PrefetchScalarGridSpec(
            num_scalar_prefetch=0,
            grid=(B_pad // tile,),
            in_specs=in_specs,
            out_specs=out_spec,
        ),
        compiler_params=pltpu.CompilerParams(
            dimension_semantics=("parallel",)),
    )(x_in, *flat_params)

    return out[:B] if B_pad != B else out


def init_params(key, image_size):
    """Deterministic init matching PyTorch Linear shapes.
    Returns [(W, b)] with W of shape (in, out), b of shape (1, out)."""
    dims = [(image_size, 128), (128, 64), (64, 10), (10, 10), (10, 10), (10, 10)]
    params = []
    for (din, dout) in dims:
        key, kw, kb = jax.random.split(key, 3)
        bound = 1.0 / jnp.sqrt(jnp.float32(din))
        w = jax.random.uniform(kw, (din, dout), jnp.float32, -bound, bound)
        b = jax.random.uniform(kb, (1, dout), jnp.float32, -bound, bound)
        params.append((w, b))
    return params


def _reference(x, params, model_letter):
    h = x
    for (w, b) in params:
        y = h @ w + b
        h = jnp.maximum(y, 0.0) if model_letter == "E" else jax.nn.sigmoid(y)
    return jax.nn.log_softmax(h, axis=1)


if __name__ == "__main__":
    key = jax.random.PRNGKey(0)
    k_x, k_p = jax.random.split(key)

    image_size = 32
    batch = 12                      # deliberately NOT a multiple of the tile
    x = jax.random.normal(k_x, (batch, image_size), jnp.float32)
    params = init_params(k_p, image_size)

    ok = True
    for letter in ("E", "F"):
        ref = _reference(x, params, letter)

        # Exact structural check with the f32 matmul path.
        out_f32 = jax.block_until_ready(
            model_type2_forward(x, params, letter, matmul_dtype=jnp.float32))
        if out_f32.shape != ref.shape or not jnp.allclose(out_f32, ref,
                                                          atol=1e-5, rtol=1e-5):
            ok = False

        # Default (bf16 matmul operands, f32 accumulation) path: loose tolerance.
        out_bf16 = jax.block_until_ready(
            model_type2_forward(x, params, letter))
        if out_bf16.shape != ref.shape or not jnp.allclose(out_bf16, ref,
                                                           atol=5e-2, rtol=5e-2):
            ok = False

    if ok:
        print("KERNEL_OK")
    else:
        print("KERNEL_MISMATCH")
</pallas_src>

<mosaic_0001>
module attributes {stable_mosaic.version = 11 : i64} {
  func.func @_mlp_kernel(%arg0: i32, %arg1: memref<8x32xf32, #tpu.memory_space<vmem>>, %arg2: memref<32x128xf32, #tpu.memory_space<vmem>>, %arg3: memref<1x128xf32, #tpu.memory_space<vmem>>, %arg4: memref<128x64xf32, #tpu.memory_space<vmem>>, %arg5: memref<1x64xf32, #tpu.memory_space<vmem>>, %arg6: memref<64x10xf32, #tpu.memory_space<vmem>>, %arg7: memref<1x10xf32, #tpu.memory_space<vmem>>, %arg8: memref<10x10xf32, #tpu.memory_space<vmem>>, %arg9: memref<1x10xf32, #tpu.memory_space<vmem>>, %arg10: memref<10x10xf32, #tpu.memory_space<vmem>>, %arg11: memref<1x10xf32, #tpu.memory_space<vmem>>, %arg12: memref<10x10xf32, #tpu.memory_space<vmem>>, %arg13: memref<1x10xf32, #tpu.memory_space<vmem>>, %arg14: memref<8x10xf32, #tpu.memory_space<vmem>>) attributes {dimension_semantics = [#tpu.dimension_semantics<parallel>], iteration_bounds = array<i64: 2>, scalar_prefetch = 0 : i64, scratch_operands = 0 : i64, tpu.core_type = #tpu.core_type<tc>, window_params = [{transform_indices = @transform_0, window_bounds = array<i64: 8, 32>}, {pipeline_mode = #tpu.pipeline_mode<synchronous>, transform_indices = @transform_1, window_bounds = array<i64: 32, 128>}, {pipeline_mode = #tpu.pipeline_mode<synchronous>, transform_indices = @transform_2, window_bounds = array<i64: 1, 128>}, {pipeline_mode = #tpu.pipeline_mode<synchronous>, transform_indices = @transform_3, window_bounds = array<i64: 128, 64>}, {pipeline_mode = #tpu.pipeline_mode<synchronous>, transform_indices = @transform_4, window_bounds = array<i64: 1, 64>}, {pipeline_mode = #tpu.pipeline_mode<synchronous>, transform_indices = @transform_5, window_bounds = array<i64: 64, 10>}, {pipeline_mode = #tpu.pipeline_mode<synchronous>, transform_indices = @transform_6, window_bounds = array<i64: 1, 10>}, {pipeline_mode = #tpu.pipeline_mode<synchronous>, transform_indices = @transform_7, window_bounds = array<i64: 10, 10>}, {pipeline_mode = #tpu.pipeline_mode<synchronous>, transform_indices = @transform_8, window_bounds = array<i64: 1, 10>}, {pipeline_mode = #tpu.pipeline_mode<synchronous>, transform_indices = @transform_9, window_bounds = array<i64: 10, 10>}, {pipeline_mode = #tpu.pipeline_mode<synchronous>, transform_indices = @transform_10, window_bounds = array<i64: 1, 10>}, {pipeline_mode = #tpu.pipeline_mode<synchronous>, transform_indices = @transform_11, window_bounds = array<i64: 10, 10>}, {pipeline_mode = #tpu.pipeline_mode<synchronous>, transform_indices = @transform_12, window_bounds = array<i64: 1, 10>}, {transform_indices = @transform_13, window_bounds = array<i64: 8, 10>}]} {
    %c0 = arith.constant 0 : index
    %c0_0 = arith.constant 0 : index
    %0 = vector.load %arg1[%c0, %c0_0] : memref<8x32xf32, #tpu.memory_space<vmem>>, vector<8x32xf32>
    %c0_1 = arith.constant 0 : index
    %c0_2 = arith.constant 0 : index
    %1 = vector.load %arg2[%c0_1, %c0_2] : memref<32x128xf32, #tpu.memory_space<vmem>>, vector<32x128xf32>
    %cst = arith.constant dense<0.000000e+00> : vector<8x128xf32>
    %2 = tpu.matmul %0, %1, %cst {dimension_numbers = #tpu.dot_dimension_numbers<[1], [0], [0], [1], [0, 0, 1, 1], [], []>} : vector<8x32xf32>, vector<32x128xf32>, vector<8x128xf32> -> vector<8x128xf32>
    %c0_3 = arith.constant 0 : index
    %c0_4 = arith.constant 0 : index
    %3 = vector.load %arg3[%c0_3, %c0_4] : memref<1x128xf32, #tpu.memory_space<vmem>>, vector<1x128xf32>
    %4 = vector.broadcast %3 : vector<1x128xf32> to vector<8x128xf32>
    %5 = arith.addf %2, %4 : vector<8x128xf32>
    %cst_5 = arith.constant 0.000000e+00 : f32
    %6 = vector.broadcast %cst_5 : f32 to vector<8x128xf32>
    %7 = arith.maximumf %5, %6 : vector<8x128xf32>
    %c0_6 = arith.constant 0 : index
    %c0_7 = arith.constant 0 : index
    %8 = vector.load %arg4[%c0_6, %c0_7] : memref<128x64xf32, #tpu.memory_space<vmem>>, vector<128x64xf32>
    %cst_8 = arith.constant dense<0.000000e+00> : vector<8x64xf32>
    %9 = tpu.matmul %7, %8, %cst_8 {dimension_numbers = #tpu.dot_dimension_numbers<[1], [0], [0], [1], [0, 0, 1, 1], [], []>} : vector<8x128xf32>, vector<128x64xf32>, vector<8x64xf32> -> vector<8x64xf32>
    %c0_9 = arith.constant 0 : index
    %c0_10 = arith.constant 0 : index
    %10 = vector.load %arg5[%c0_9, %c0_10] : memref<1x64xf32, #tpu.memory_space<vmem>>, vector<1x64xf32>
    %11 = vector.broadcast %10 : vector<1x64xf32> to vector<8x64xf32>
    %12 = arith.addf %9, %11 : vector<8x64xf32>
    %cst_11 = arith.constant 0.000000e+00 : f32
    %13 = vector.broadcast %cst_11 : f32 to vector<8x64xf32>
    %14 = arith.maximumf %12, %13 : vector<8x64xf32>
    %c0_12 = arith.constant 0 : index
    %c0_13 = arith.constant 0 : index
    %15 = vector.load %arg6[%c0_12, %c0_13] : memref<64x10xf32, #tpu.memory_space<vmem>>, vector<64x10xf32>
    %cst_14 = arith.constant dense<0.000000e+00> : vector<8x10xf32>
    %16 = tpu.matmul %14, %15, %cst_14 {dimension_numbers = #tpu.dot_dimension_numbers<[1], [0], [0], [1], [0, 0, 1, 1], [], []>} : vector<8x64xf32>, vector<64x10xf32>, vector<8x10xf32> -> vector<8x10xf32>
    %c0_15 = arith.constant 0 : index
    %c0_16 = arith.constant 0 : index
    %17 = vector.load %arg7[%c0_15, %c0_16] : memref<1x10xf32, #tpu.memory_space<vmem>>, vector<1x10xf32>
    %18 = vector.broadcast %17 : vector<1x10xf32> to vector<8x10xf32>
    %19 = arith.addf %16, %18 : vector<8x10xf32>
    %cst_17 = arith.constant 0.000000e+00 : f32
    %20 = vector.broadcast %cst_17 : f32 to vector<8x10xf32>
    %21 = arith.maximumf %19, %20 : vector<8x10xf32>
    %c0_18 = arith.constant 0 : index
    %c0_19 = arith.constant 0 : index
    %22 = vector.load %arg8[%c0_18, %c0_19] : memref<10x10xf32, #tpu.memory_space<vmem>>, vector<10x10xf32>
    %cst_20 = arith.constant dense<0.000000e+00> : vector<8x10xf32>
    %23 = tpu.matmul %21, %22, %cst_20 {dimension_numbers = #tpu.dot_dimension_numbers<[1], [0], [0], [1], [0, 0, 1, 1], [], []>} : vector<8x10xf32>, vector<10x10xf32>, vector<8x10xf32> -> vector<8x10xf32>
    %c0_21 = arith.constant 0 : index
    %c0_22 = arith.constant 0 : index
    %24 = vector.load %arg9[%c0_21, %c0_22] : memref<1x10xf32, #tpu.memory_space<vmem>>, vector<1x10xf32>
    %25 = vector.broadcast %24 : vector<1x10xf32> to vector<8x10xf32>
    %26 = arith.addf %23, %25 : vector<8x10xf32>
    %cst_23 = arith.constant 0.000000e+00 : f32
    %27 = vector.broadcast %cst_23 : f32 to vector<8x10xf32>
    %28 = arith.maximumf %26, %27 : vector<8x10xf32>
    %c0_24 = arith.constant 0 : index
    %c0_25 = arith.constant 0 : index
    %29 = vector.load %arg10[%c0_24, %c0_25] : memref<10x10xf32, #tpu.memory_space<vmem>>, vector<10x10xf32>
    %cst_26 = arith.constant dense<0.000000e+00> : vector<8x10xf32>
    %30 = tpu.matmul %28, %29, %cst_26 {dimension_numbers = #tpu.dot_dimension_numbers<[1], [0], [0], [1], [0, 0, 1, 1], [], []>} : vector<8x10xf32>, vector<10x10xf32>, vector<8x10xf32> -> vector<8x10xf32>
    %c0_27 = arith.constant 0 : index
    %c0_28 = arith.constant 0 : index
    %31 = vector.load %arg11[%c0_27, %c0_28] : memref<1x10xf32, #tpu.memory_space<vmem>>, vector<1x10xf32>
    %32 = vector.broadcast %31 : vector<1x10xf32> to vector<8x10xf32>
    %33 = arith.addf %30, %32 : vector<8x10xf32>
    %cst_29 = arith.constant 0.000000e+00 : f32
    %34 = vector.broadcast %cst_29 : f32 to vector<8x10xf32>
    %35 = arith.maximumf %33, %34 : vector<8x10xf32>
    %c0_30 = arith.constant 0 : index
    %c0_31 = arith.constant 0 : index
    %36 = vector.load %arg12[%c0_30, %c0_31] : memref<10x10xf32, #tpu.memory_space<vmem>>, vector<10x10xf32>
    %cst_32 = arith.constant dense<0.000000e+00> : vector<8x10xf32>
    %37 = tpu.matmul %35, %36, %cst_32 {dimension_numbers = #tpu.dot_dimension_numbers<[1], [0], [0], [1], [0, 0, 1, 1], [], []>} : vector<8x10xf32>, vector<10x10xf32>, vector<8x10xf32> -> vector<8x10xf32>
    %c0_33 = arith.constant 0 : index
    %c0_34 = arith.constant 0 : index
    %38 = vector.load %arg13[%c0_33, %c0_34] : memref<1x10xf32, #tpu.memory_space<vmem>>, vector<1x10xf32>
    %39 = vector.broadcast %38 : vector<1x10xf32> to vector<8x10xf32>
    %40 = arith.addf %37, %39 : vector<8x10xf32>
    %cst_35 = arith.constant 0.000000e+00 : f32
    %41 = vector.broadcast %cst_35 : f32 to vector<8x10xf32>
    %42 = arith.maximumf %40, %41 : vector<8x10xf32>
    %cst_36 = arith.constant dense<0xFF800000> : vector<8xf32>
    %43 = vector.multi_reduction <maximumf>, %42, %cst_36 [1] : vector<8x10xf32> to vector<8xf32>
    %44 = vector.shape_cast %43 : vector<8xf32> to vector<8x1xf32>
    %45 = vector.broadcast %44 : vector<8x1xf32> to vector<8x10xf32>
    %46 = arith.subf %42, %45 : vector<8x10xf32>
    %47 = math.exp %46 : vector<8x10xf32>
    %cst_37 = arith.constant dense<0.000000e+00> : vector<8xf32>
    %48 = vector.multi_reduction <add>, %47, %cst_37 [1] : vector<8x10xf32> to vector<8xf32>
    %49 = vector.shape_cast %48 : vector<8xf32> to vector<8x1xf32>
    %50 = math.log %49 : vector<8x1xf32>
    %51 = vector.broadcast %50 : vector<8x1xf32> to vector<8x10xf32>
    %52 = arith.subf %46, %51 : vector<8x10xf32>
    %c0_38 = arith.constant 0 : index
    %c0_39 = arith.constant 0 : index
    %53 = vector.load %arg14[%c0_38, %c0_39] : memref<8x10xf32, #tpu.memory_space<vmem>>, vector<8x10xf32>
    tpu.vector_store %arg14[%c0_38, %c0_39], %52 {strides = array<i32>} : memref<8x10xf32, #tpu.memory_space<vmem>>, vector<8x10xf32>,
    return
  }
  func.func @transform_0(%arg0: i32) -> (i32, i32) {
    %c0_i32 = arith.constant 0 : i32
    %c0_i32_0 = arith.constant 0 : i32
    return %arg0, %c0_i32 : i32, i32
  }
  func.func @transform_1(%arg0: i32) -> (i32, i32) {
    %c0_i32 = arith.constant 0 : i32
    %c0_i32_0 = arith.constant 0 : i32
    %c0_i32_1 = arith.constant 0 : i32
    return %c0_i32, %c0_i32_0 : i32, i32
  }
  func.func @transform_2(%arg0: i32) -> (i32, i32) {
    %c0_i32 = arith.constant 0 : i32
    %c0_i32_0 = arith.constant 0 : i32
    %c0_i32_1 = arith.constant 0 : i32
    return %c0_i32, %c0_i32_0 : i32, i32
  }
  func.func @transform_3(%arg0: i32) -> (i32, i32) {
    %c0_i32 = arith.constant 0 : i32
    %c0_i32_0 = arith.constant 0 : i32
    %c0_i32_1 = arith.constant 0 : i32
    return %c0_i32, %c0_i32_0 : i32, i32
  }
  func.func @transform_4(%arg0: i32) -> (i32, i32) {
    %c0_i32 = arith.constant 0 : i32
    %c0_i32_0 = arith.constant 0 : i32
    %c0_i32_1 = arith.constant 0 : i32
    return %c0_i32, %c0_i32_0 : i32, i32
  }
  func.func @transform_5(%arg0: i32) -> (i32, i32) {
    %c0_i32 = arith.constant 0 : i32
    %c0_i32_0 = arith.constant 0 : i32
    %c0_i32_1 = arith.constant 0 : i32
    return %c0_i32, %c0_i32_0 : i32, i32
  }
  func.func @transform_6(%arg0: i32) -> (i32, i32) {
    %c0_i32 = arith.constant 0 : i32
    %c0_i32_0 = arith.constant 0 : i32
    %c0_i32_1 = arith.constant 0 : i32
    return %c0_i32, %c0_i32_0 : i32, i32
  }
  func.func @transform_7(%arg0: i32) -> (i32, i32) {
    %c0_i32 = arith.constant 0 : i32
    %c0_i32_0 = arith.constant 0 : i32
    %c0_i32_1 = arith.constant 0 : i32
    return %c0_i32, %c0_i32_0 : i32, i32
  }
  func.func @transform_8(%arg0: i32) -> (i32, i32) {
    %c0_i32 = arith.constant 0 : i32
    %c0_i32_0 = arith.constant 0 : i32
    %c0_i32_1 = arith.constant 0 : i32
    return %c0_i32, %c0_i32_0 : i32, i32
  }
  func.func @transform_9(%arg0: i32) -> (i32, i32) {
    %c0_i32 = arith.constant 0 : i32
    %c0_i32_0 = arith.constant 0 : i32
    %c0_i32_1 = arith.constant 0 : i32
    return %c0_i32, %c0_i32_0 : i32, i32
  }
  func.func @transform_10(%arg0: i32) -> (i32, i32) {
    %c0_i32 = arith.constant 0 : i32
    %c0_i32_0 = arith.constant 0 : i32
    %c0_i32_1 = arith.constant 0 : i32
    return %c0_i32, %c0_i32_0 : i32, i32
  }
  func.func @transform_11(%arg0: i32) -> (i32, i32) {
    %c0_i32 = arith.constant 0 : i32
    %c0_i32_0 = arith.constant 0 : i32
    %c0_i32_1 = arith.constant 0 : i32
    return %c0_i32, %c0_i32_0 : i32, i32
  }
  func.func @transform_12(%arg0: i32) -> (i32, i32) {
    %c0_i32 = arith.constant 0 : i32
    %c0_i32_0 = arith.constant 0 : i32
    %c0_i32_1 = arith.constant 0 : i32
    return %c0_i32, %c0_i32_0 : i32, i32
  }
  func.func @transform_13(%arg0: i32) -> (i32, i32) {
    %c0_i32 = arith.constant 0 : i32
    %c0_i32_0 = arith.constant 0 : i32
    return %arg0, %c0_i32 : i32, i32
  }
}

</mosaic_0001>

<llo_original>
// kernel: tpu_custom_call.1
$region0: #{tpu_custom_call.1}
  #allocation0 [shape = 'u32[]', space=smem, size = 0x4, offset = 0x4, fixed_abs, tag = 'smem constant byte address 0x4 - core index']
  #allocation1 [shape = 'u32[144,128]{1,0:T(1,128)}', space=vmem, size = 0x12000, scoped, tag = 'internal scratch']
  %s0 = inlined_call_operand.vmem [shape: f32[16,32], index: 0, kind: input, shape index: {}]
  %s1 = inlined_call_operand.vmem [shape: f32[32,128], index: 1, kind: input, shape index: {}]
  %s2 = inlined_call_operand.vmem [shape: f32[1,128], index: 2, kind: input, shape index: {}]
  %s3 = inlined_call_operand.vmem [shape: f32[128,64], index: 3, kind: input, shape index: {}]
  %s4 = inlined_call_operand.vmem [shape: f32[1,64], index: 4, kind: input, shape index: {}]
  %s5 = inlined_call_operand.vmem [shape: f32[64,10], index: 5, kind: input, shape index: {}]
  %s6 = inlined_call_operand.vmem [shape: f32[1,10], index: 6, kind: input, shape index: {}]
  %s7 = inlined_call_operand.vmem [shape: f32[10,10], index: 7, kind: input, shape index: {}]
  %s8 = inlined_call_operand.vmem [shape: f32[1,10], index: 8, kind: input, shape index: {}]
  %s9 = inlined_call_operand.vmem [shape: f32[10,10], index: 9, kind: input, shape index: {}]
  %s10 = inlined_call_operand.vmem [shape: f32[1,10], index: 10, kind: input, shape index: {}]
  %s11 = inlined_call_operand.vmem [shape: f32[10,10], index: 11, kind: input, shape index: {}]
  %s12 = inlined_call_operand.vmem [shape: f32[1,10], index: 12, kind: input, shape index: {}]
  %s13 = inlined_call_operand.hbm [shape: f32[16,10], index: 13, kind: output, shape index: {}]
  %s14 = sld [smem:[#allocation0]]
  $region85: #{tpu_custom_call.1} parent=0
    _
  %s16 = ssub.s32 1, %s14
  %s17 = scalar_select 0, %s16, %s14
  $region1: #{tpu_custom_call.1} parent=0
    #allocation2 [shape = 'u8[8192]{0}', space=vmem, size = 0x2000, scoped, tag = 'output window, operand 0']
    #allocation3 [shape = 's32[2]{0}', space=sflag, size = 0x8, scoped, tag = 'scoped memory for tpu_custom_call.1']
    %18 = vsyncpa [#allocation3], 0
    %s19 = scalar_lea.sflag [#allocation3], 1
    %20 = vsyncpa %s19, 0
    loop: start=0, step=1, limit=4
    $region2: #{tpu_custom_call.1} parent=1 // loop_pre_header
      _
    $region3: #{tpu_custom_call.1} parent=1 // loop_header
      %s22 = sphi 0, %s26
      %p23 = scmp.ge.s32.totalorder %s22, 4
      %s32 = sphi 0, %s34
      %s35 = sphi 0, %s32
      %s36 = sphi 0, %s35
      %s52 = sphi 0, %s36
      %s56 = sphi 0, %s56
      %s58 = sphi 0, %s56
      %s59 = sphi 0, %s58
      %s73 = sphi 0, %s59
      %s77 = sphi 0, %s77
      %s79 = sphi 0, %s77
      %s80 = sphi 0, %s79
      %s94 = sphi 0, %s80
      %s98 = sphi 0, %s98
      %s100 = sphi 0, %s98
      %s101 = sphi 0, %s100
      %s115 = sphi 0, %s101
      %s119 = sphi 0, %s119
      %s121 = sphi 0, %s119
      %s122 = sphi 0, %s121
      %s136 = sphi 0, %s122
      %s140 = sphi 0, %s140
      %s142 = sphi 0, %s140
      %s143 = sphi 0, %s142
      %s157 = sphi 0, %s143
      %s161 = sphi 0, %s161
      %s163 = sphi 0, %s161
      %s164 = sphi 0, %s163
      %s178 = sphi 0, %s164
      %s182 = sphi 0, %s182
      %s184 = sphi 0, %s182
      %s185 = sphi 0, %s184
      %s199 = sphi 0, %s185
      %s203 = sphi 0, %s203
      %s205 = sphi 0, %s203
      %s206 = sphi 0, %s205
      %s220 = sphi 0, %s206
      %s224 = sphi 0, %s224
      %s226 = sphi 0, %s224
      %s227 = sphi 0, %s226
      %s241 = sphi 0, %s227
      %s245 = sphi 0, %s245
      %s247 = sphi 0, %s245
      %s248 = sphi 0, %s247
      %s262 = sphi 0, %s248
      %s266 = sphi 0, %s266
      %s268 = sphi 0, %s266
      %s269 = sphi 0, %s268
      %s283 = sphi 0, %s269
      %s287 = sphi 0, %s287
      %s289 = sphi 0, %s287
      %s290 = sphi 0, %s289
      %s304 = sphi 0, %s290
      %s310 = sphi 0, %s312
      %s313 = sphi 0, %s310
      %s314 = sphi 0, %s313
      %s330 = sphi 0, %s314
    $region4: #{tpu_custom_call.1} parent=1 // loop_header_branch
      %25 = sbr.rel (%p23) target = $region8
    $region5: #{tpu_custom_call.1} parent=1 // loop_body
      %s27 = ssub.s32 %s22, 1
      %s28 = ssub.s32 %s22, 2
      %s29 = sadd.s32 %s22, 1
      %s30 = ssub.s32 %s22, %s29
      %p31 = scmp.eq.s32.totalorder %s30, 0
      %s33 = sadd.s32 %s32, 1
      %s34 = scalar_select %p31, %s32, %s33
      %p37 = pneg %p31
      %p38 = scmp.eq.s32.totalorder %s22, 1
      %p39 = por %p37, %p38
      %p40 = scmp.ne.s32.totalorder %s32, %s35
      %p41 = scmp.eq.s32.totalorder %s22, 0
      %p42 = por %p40, %p41
      %p43 = scmp.ne.s32.totalorder %s32, %s35
      %p44 = scmp.eq.s32.totalorder %s27, 1
      %p45 = por %p43, %p44
      %p46 = scmp.ne.s32.totalorder %s35, %s36
      %p47 = scmp.eq.s32.totalorder %s27, 0
      %p48 = por %p46, %p47
      %p49 = scmp.ne.s32.totalorder %s35, %s36
      %p50 = scmp.eq.s32.totalorder %s28, 1
      %p51 = por %p49, %p50
      %p53 = scmp.ne.s32.totalorder %s36, %s52
      %p54 = scmp.eq.s32.totalorder %s28, 0
      %p55 = por %p53, %p54
      %s57 = sadd.s32 %s56, 1
      %p60 = scmp.eq.s32.totalorder %s22, 1
      %p61 = scmp.ne.s32.totalorder %s56, %s58
      %p62 = scmp.eq.s32.totalorder %s22, 0
      %p63 = por %p61, %p62
      %p64 = scmp.ne.s32.totalorder %s56, %s58
      %p65 = scmp.eq.s32.totalorder %s27, 1
      %p66 = por %p64, %p65
      %p67 = scmp.ne.s32.totalorder %s58, %s59
      %p68 = scmp.eq.s32.totalorder %s27, 0
      %p69 = por %p67, %p68
      %p70 = scmp.ne.s32.totalorder %s58, %s59
      %p71 = scmp.eq.s32.totalorder %s28, 1
      %p72 = por %p70, %p71
      %p74 = scmp.ne.s32.totalorder %s59, %s73
      %p75 = scmp.eq.s32.totalorder %s28, 0
      %p76 = por %p74, %p75
      %s78 = sadd.s32 %s77, 1
      %p81 = scmp.eq.s32.totalorder %s22, 1
      %p82 = scmp.ne.s32.totalorder %s77, %s79
      %p83 = scmp.eq.s32.totalorder %s22, 0
      %p84 = por %p82, %p83
      %p85 = scmp.ne.s32.totalorder %s77, %s79
      %p86 = scmp.eq.s32.totalorder %s27, 1
      %p87 = por %p85, %p86
      %p88 = scmp.ne.s32.totalorder %s79, %s80
      %p89 = scmp.eq.s32.totalorder %s27, 0
      %p90 = por %p88, %p89
      %p91 = scmp.ne.s32.totalorder %s79, %s80
      %p92 = scmp.eq.s32.totalorder %s28, 1
      %p93 = por %p91, %p92
      %p95 = scmp.ne.s32.totalorder %s80, %s94
      %p96 = scmp.eq.s32.totalorder %s28, 0
      %p97 = por %p95, %p96
      %s99 = sadd.s32 %s98, 1
      %p102 = scmp.eq.s32.totalorder %s22, 1
      %p103 = scmp.ne.s32.totalorder %s98, %s100
      %p104 = scmp.eq.s32.totalorder %s22, 0
      %p105 = por %p103, %p104
      %p106 = scmp.ne.s32.totalorder %s98, %s100
      %p107 = scmp.eq.s32.totalorder %s27, 1
      %p108 = por %p106, %p107
      %p109 = scmp.ne.s32.totalorder %s100, %s101
      %p110 = scmp.eq.s32.totalorder %s27, 0
      %p111 = por %p109, %p110
      %p112 = scmp.ne.s32.totalorder %s100, %s101
      %p113 = scmp.eq.s32.totalorder %s28, 1
      %p114 = por %p112, %p113
      %p116 = scmp.ne.s32.totalorder %s101, %s115
      %p117 = scmp.eq.s32.totalorder %s28, 0
      %p118 = por %p116, %p117
      %s120 = sadd.s32 %s119, 1
      %p123 = scmp.eq.s32.totalorder %s22, 1
      %p124 = scmp.ne.s32.totalorder %s119, %s121
      %p125 = scmp.eq.s32.totalorder %s22, 0
      %p126 = por %p124, %p125
      %p127 = scmp.ne.s32.totalorder %s119, %s121
      %p128 = scmp.eq.s32.totalorder %s27, 1
      %p129 = por %p127, %p128
      %p130 = scmp.ne.s32.totalorder %s121, %s122
      %p131 = scmp.eq.s32.totalorder %s27, 0
      %p132 = por %p130, %p131
      %p133 = scmp.ne.s32.totalorder %s121, %s122
      %p134 = scmp.eq.s32.totalorder %s28, 1
      %p135 = por %p133, %p134
      %p137 = scmp.ne.s32.totalorder %s122, %s136
      %p138 = scmp.eq.s32.totalorder %s28, 0
      %p139 = por %p137, %p138
      %s141 = sadd.s32 %s140, 1
      %p144 = scmp.eq.s32.totalorder %s22, 1
      %p145 = scmp.ne.s32.totalorder %s140, %s142
      %p146 = scmp.eq.s32.totalorder %s22, 0
      %p147 = por %p145, %p146
      %p148 = scmp.ne.s32.totalorder %s140, %s142
      %p149 = scmp.eq.s32.totalorder %s27, 1
      %p150 = por %p148, %p149
      %p151 = scmp.ne.s32.totalorder %s142, %s143
      %p152 = scmp.eq.s32.totalorder %s27, 0
      %p153 = por %p151, %p152
      %p154 = scmp.ne.s32.totalorder %s142, %s143
      %p155 = scmp.eq.s32.totalorder %s28, 1
      %p156 = por %p154, %p155
      %p158 = scmp.ne.s32.totalorder %s143, %s157
      %p159 = scmp.eq.s32.totalorder %s28, 0
      %p160 = por %p158, %p159
      %s162 = sadd.s32 %s161, 1
      %p165 = scmp.eq.s32.totalorder %s22, 1
      %p166 = scmp.ne.s32.totalorder %s161, %s163
      %p167 = scmp.eq.s32.totalorder %s22, 0
      %p168 = por %p166, %p167
      %p169 = scmp.ne.s32.totalorder %s161, %s163
      %p170 = scmp.eq.s32.totalorder %s27, 1
      %p171 = por %p169, %p170
      %p172 = scmp.ne.s32.totalorder %s163, %s164
      %p173 = scmp.eq.s32.totalorder %s27, 0
      %p174 = por %p172, %p173
      %p175 = scmp.ne.s32.totalorder %s163, %s164
      %p176 = scmp.eq.s32.totalorder %s28, 1
      %p177 = por %p175, %p176
      %p179 = scmp.ne.s32.totalorder %s164, %s178
      %p180 = scmp.eq.s32.totalorder %s28, 0
      %p181 = por %p179, %p180
      %s183 = sadd.s32 %s182, 1
      %p186 = scmp.eq.s32.totalorder %s22, 1
      %p187 = scmp.ne.s32.totalorder %s182, %s184
      %p188 = scmp.eq.s32.totalorder %s22, 0
      %p189 = por %p187, %p188
      %p190 = scmp.ne.s32.totalorder %s182, %s184
      %p191 = scmp.eq.s32.totalorder %s27, 1
      %p192 = por %p190, %p191
      %p193 = scmp.ne.s32.totalorder %s184, %s185
      %p194 = scmp.eq.s32.totalorder %s27, 0
      %p195 = por %p193, %p194
      %p196 = scmp.ne.s32.totalorder %s184, %s185
      %p197 = scmp.eq.s32.totalorder %s28, 1
      %p198 = por %p196, %p197
      %p200 = scmp.ne.s32.totalorder %s185, %s199
      %p201 = scmp.eq.s32.totalorder %s28, 0
      %p202 = por %p200, %p201
      %s204 = sadd.s32 %s203, 1
      %p207 = scmp.eq.s32.totalorder %s22, 1
      %p208 = scmp.ne.s32.totalorder %s203, %s205
      %p209 = scmp.eq.s32.totalorder %s22, 0
      %p210 = por %p208, %p209
      %p211 = scmp.ne.s32.totalorder %s203, %s205
      %p212 = scmp.eq.s32.totalorder %s27, 1
      %p213 = por %p211, %p212
      %p214 = scmp.ne.s32.totalorder %s205, %s206
      %p215 = scmp.eq.s32.totalorder %s27, 0
      %p216 = por %p214, %p215
      %p217 = scmp.ne.s32.totalorder %s205, %s206
      %p218 = scmp.eq.s32.totalorder %s28, 1
      %p219 = por %p217, %p218
      %p221 = scmp.ne.s32.totalorder %s206, %s220
      %p222 = scmp.eq.s32.totalorder %s28, 0
      %p223 = por %p221, %p222
      %s225 = sadd.s32 %s224, 1
      %p228 = scmp.eq.s32.totalorder %s22, 1
      %p229 = scmp.ne.s32.totalorder %s224, %s226
      %p230 = scmp.eq.s32.totalorder %s22, 0
      %p231 = por %p229, %p230
      %p232 = scmp.ne.s32.totalorder %s224, %s226
      %p233 = scmp.eq.s32.totalorder %s27, 1
      %p234 = por %p232, %p233
      %p235 = scmp.ne.s32.totalorder %s226, %s227
      %p236 = scmp.eq.s32.totalorder %s27, 0
      %p237 = por %p235, %p236
      %p238 = scmp.ne.s32.totalorder %s226, %s227
      %p239 = scmp.eq.s32.totalorder %s28, 1
      %p240 = por %p238, %p239
      %p242 = scmp.ne.s32.totalorder %s227, %s241
      %p243 = scmp.eq.s32.totalorder %s28, 0
      %p244 = por %p242, %p243
      %s246 = sadd.s32 %s245, 1
      %p249 = scmp.eq.s32.totalorder %s22, 1
      %p250 = scmp.ne.s32.totalorder %s245, %s247
      %p251 = scmp.eq.s32.totalorder %s22, 0
      %p252 = por %p250, %p251
      %p253 = scmp.ne.s32.totalorder %s245, %s247
      %p254 = scmp.eq.s32.totalorder %s27, 1
      %p255 = por %p253, %p254
      %p256 = scmp.ne.s32.totalorder %s247, %s248
      %p257 = scmp.eq.s32.totalorder %s27, 0
      %p258 = por %p256, %p257
      %p259 = scmp.ne.s32.totalorder %s247, %s248
      %p260 = scmp.eq.s32.totalorder %s28, 1
      %p261 = por %p259, %p260
      %p263 = scmp.ne.s32.totalorder %s248, %s262
      %p264 = scmp.eq.s32.totalorder %s28, 0
      %p265 = por %p263, %p264
      %s267 = sadd.s32 %s266, 1
      %p270 = scmp.eq.s32.totalorder %s22, 1
      %p271 = scmp.ne.s32.totalorder %s266, %s268
      %p272 = scmp.eq.s32.totalorder %s22, 0
      %p273 = por %p271, %p272
      %p274 = scmp.ne.s32.totalorder %s266, %s268
      %p275 = scmp.eq.s32.totalorder %s27, 1
      %p276 = por %p274, %p275
      %p277 = scmp.ne.s32.totalorder %s268, %s269
      %p278 = scmp.eq.s32.totalorder %s27, 0
      %p279 = por %p277, %p278
      %p280 = scmp.ne.s32.totalorder %s268, %s269
      %p281 = scmp.eq.s32.totalorder %s28, 1
      %p282 = por %p280, %p281
      %p284 = scmp.ne.s32.totalorder %s269, %s283
      %p285 = scmp.eq.s32.totalorder %s28, 0
      %p286 = por %p284, %p285
      %s288 = sadd.s32 %s287, 1
      %p291 = scmp.eq.s32.totalorder %s22, 1
      %p292 = scmp.ne.s32.totalorder %s287, %s289
      %p293 = scmp.eq.s32.totalorder %s22, 0
      %p294 = por %p292, %p293
      %p295 = scmp.ne.s32.totalorder %s287, %s289
      %p296 = scmp.eq.s32.totalorder %s27, 1
      %p297 = por %p295, %p296
      %p298 = scmp.ne.s32.totalorder %s289, %s290
      %p299 = scmp.eq.s32.totalorder %s27, 0
      %p300 = por %p298, %p299
      %p301 = scmp.ne.s32.totalorder %s289, %s290
      %p302 = scmp.eq.s32.totalorder %s28, 1
      %p303 = por %p301, %p302
      %p305 = scmp.ne.s32.totalorder %s290, %s304
      %p306 = scmp.eq.s32.totalorder %s28, 0
      %p307 = por %p305, %p306
      %s308 = ssub.s32 %s22, %s29
      %p309 = scmp.eq.s32.totalorder %s308, 0
      %s311 = sadd.s32 %s310, 1
      %s312 = scalar_select %p309, %s310, %s311
      %p315 = pneg %p309
      %p316 = scmp.eq.s32.totalorder %s22, 1
      %p317 = por %p315, %p316
      %p318 = scmp.ne.s32.totalorder %s310, %s313
      %p319 = scmp.eq.s32.totalorder %s22, 0
      %p320 = por %p318, %p319
      %p321 = scmp.ne.s32.totalorder %s310, %s313
      %p322 = scmp.eq.s32.totalorder %s27, 1
      %p323 = por %p321, %p322
      %p324 = scmp.ne.s32.totalorder %s313, %s314
      %p325 = scmp.eq.s32.totalorder %s27, 0
      %p326 = por %p324, %p325
      %p327 = scmp.ne.s32.totalorder %s313, %s314
      %p328 = scmp.eq.s32.totalorder %s28, 1
      %p329 = por %p327, %p328
      %p331 = scmp.ne.s32.totalorder %s314, %s330
      %p332 = scmp.eq.s32.totalorder %s28, 0
      %p333 = por %p331, %p332
      %p334 = scmp.le.s32.totalorder 1, %s22
      %p335 = scmp.lt.s32.totalorder %s22, 3
      %p336 = pnand %p334, %p335
      %p337 = pneg %p336
      // Predicated region
      $region9: #{tpu_custom_call.1} parent=5 // pred_check
        _
      $region10: #{tpu_custom_call.1} parent=5 // pred_check_branch
        %339 = sbr.rel (%p336) target = $region12
      $region11: #{tpu_custom_call.1} parent=5 // pred_region
        %s340 = ssub.s32 %s22, 1
        // Predicated region
        $region13: #{tpu_custom_call.1} parent=11 // pred_check
          %p341 = pneg %p69
        $region14: #{tpu_custom_call.1} parent=11 // pred_check_branch
          %343 = sbr.rel (%p341) target = $region16
        $region15: #{tpu_custom_call.1} parent=11 // pred_region
          _
        $region16: #{tpu_custom_call.1} parent=11 // pred_fallthru
          _
        // Predicated region
        $region17: #{tpu_custom_call.1} parent=11 // pred_check
          %p344 = pneg %p90
        $region18: #{tpu_custom_call.1} parent=11 // pred_check_branch
          %346 = sbr.rel (%p344) target = $region20
        $region19: #{tpu_custom_call.1} parent=11 // pred_region
          _
        $region20: #{tpu_custom_call.1} parent=11 // pred_fallthru
          _
        // Predicated region
        $region21: #{tpu_custom_call.1} parent=11 // pred_check
          %p347 = pneg %p111
        $region22: #{tpu_custom_call.1} parent=11 // pred_check_branch
          %349 = sbr.rel (%p347) target = $region24
        $region23: #{tpu_custom_call.1} parent=11 // pred_region
          _
        $region24: #{tpu_custom_call.1} parent=11 // pred_fallthru
          _
        // Predicated region
        $region25: #{tpu_custom_call.1} parent=11 // pred_check
          %p350 = pneg %p132
        $region26: #{tpu_custom_call.1} parent=11 // pred_check_branch
          %352 = sbr.rel (%p350) target = $region28
        $region27: #{tpu_custom_call.1} parent=11 // pred_region
          _
        $region28: #{tpu_custom_call.1} parent=11 // pred_fallthru
          _
        // Predicated region
        $region29: #{tpu_custom_call.1} parent=11 // pred_check
          %p353 = pneg %p153
        $region30: #{tpu_custom_call.1} parent=11 // pred_check_branch
          %355 = sbr.rel (%p353) target = $region32
        $region31: #{tpu_custom_call.1} parent=11 // pred_region
          _
        $region32: #{tpu_custom_call.1} parent=11 // pred_fallthru
          _
        // Predicated region
        $region33: #{tpu_custom_call.1} parent=11 // pred_check
          %p356 = pneg %p174
        $region34: #{tpu_custom_call.1} parent=11 // pred_check_branch
          %358 = sbr.rel (%p356) target = $region36
        $region35: #{tpu_custom_call.1} parent=11 // pred_region
          _
        $region36: #{tpu_custom_call.1} parent=11 // pred_fallthru
          _
        // Predicated region
        $region37: #{tpu_custom_call.1} parent=11 // pred_check
          %p359 = pneg %p195
        $region38: #{tpu_custom_call.1} parent=11 // pred_check_branch
          %361 = sbr.rel (%p359) target = $region40
        $region39: #{tpu_custom_call.1} parent=11 // pred_region
          _
        $region40: #{tpu_custom_call.1} parent=11 // pred_fallthru
          _
        // Predicated region
        $region41: #{tpu_custom_call.1} parent=11 // pred_check
          %p362 = pneg %p216
        $region42: #{tpu_custom_call.1} parent=11 // pred_check_branch
          %364 = sbr.rel (%p362) target = $region44
        $region43: #{tpu_custom_call.1} parent=11 // pred_region
          _
        $region44: #{tpu_custom_call.1} parent=11 // pred_fallthru
          _
        // Predicated region
        $region45: #{tpu_custom_call.1} parent=11 // pred_check
          %p365 = pneg %p237
        $region46: #{tpu_custom_call.1} parent=11 // pred_check_branch
          %367 = sbr.rel (%p365) target = $region48
        $region47: #{tpu_custom_call.1} parent=11 // pred_region
          _
        $region48: #{tpu_custom_call.1} parent=11 // pred_fallthru
          _
        // Predicated region
        $region49: #{tpu_custom_call.1} parent=11 // pred_check
          %p368 = pneg %p258
        $region50: #{tpu_custom_call.1} parent=11 // pred_check_branch
          %370 = sbr.rel (%p368) target = $region52
        $region51: #{tpu_custom_call.1} parent=11 // pred_region
          _
        $region52: #{tpu_custom_call.1} parent=11 // pred_fallthru
          _
        // Predicated region
        $region53: #{tpu_custom_call.1} parent=11 // pred_check
          %p371 = pneg %p279
        $region54: #{tpu_custom_call.1} parent=11 // pred_check_branch
          %373 = sbr.rel (%p371) target = $region56
        $region55: #{tpu_custom_call.1} parent=11 // pred_region
          _
        $region56: #{tpu_custom_call.1} parent=11 // pred_fallthru
          _
        // Predicated region
        $region57: #{tpu_custom_call.1} parent=11 // pred_check
          %p374 = pneg %p300
        $region58: #{tpu_custom_call.1} parent=11 // pred_check_branch
          %376 = sbr.rel (%p374) target = $region60
        $region59: #{tpu_custom_call.1} parent=11 // pred_region
          _
        $region60: #{tpu_custom_call.1} parent=11 // pred_fallthru
          _
      $region12: #{tpu_custom_call.1} parent=5 // pred_fallthru
        _
      %p377 = scmp.lt.s32.totalorder %s22, 2
      // Predicated region
      $region61: #{tpu_custom_call.1} parent=5 // pred_check
        %p378 = pneg %p377
      $region62: #{tpu_custom_call.1} parent=5 // pred_check_branch
        %380 = sbr.rel (%p378) target = $region64
      $region63: #{tpu_custom_call.1} parent=5 // pred_region
        // Predicated region
        $region65: #{tpu_custom_call.1} parent=63 // pred_check
          %p381 = pneg %p42
        $region66: #{tpu_custom_call.1} parent=63 // pred_check_branch
          %383 = sbr.rel (%p381) target = $region68
        $region67: #{tpu_custom_call.1} parent=63 // pred_region
          %p384 = scmp.lt.s32.totalorder %s22, 1
          %s385 = scalar_select %p384, %s22, 1
          %s386 = smul.addr %s385, 8
          %s387 = scalar_lea.vmem %s0, %s386
        $region68: #{tpu_custom_call.1} parent=63 // pred_fallthru
          _
      $region64: #{tpu_custom_call.1} parent=5 // pred_fallthru
        _
      %p388 = scmp.le.s32.totalorder 1, %s22
      %p389 = scmp.lt.s32.totalorder %s22, 3
      %p390 = pnand %p388, %p389
      %p391 = pneg %p390
      // Predicated region
      $region69: #{tpu_custom_call.1} parent=5 // pred_check
        _
      $region70: #{tpu_custom_call.1} parent=5 // pred_check_branch
        %393 = sbr.rel (%p390) target = $region72
      $region71: #{tpu_custom_call.1} parent=5 // pred_region
        %s394 = ssub.s32 %s22, 1
        %p395 = scmp.lt.s32.totalorder %s27, 1
        %s396 = scalar_select %p395, %s27, 1
        %s397 = smul.addr %s396, 8
        %s398 = scalar_lea.vmem %s0, %s397
        %p399 = pneg %p48
        %p400 = pneg %p45
        %p401 = pneg %p69
        %p402 = pneg %p66
        %p403 = pneg %p90
        %p404 = pneg %p87
        %p405 = pneg %p111
        %p406 = pneg %p108
        %p407 = pneg %p132
        %p408 = pneg %p129
        %p409 = pneg %p153
        %p410 = pneg %p150
        %p411 = pneg %p174
        %p412 = pneg %p171
        %p413 = pneg %p195
        %p414 = pneg %p192
        %p415 = pneg %p216
        %p416 = pneg %p213
        %p417 = pneg %p237
        %p418 = pneg %p234
        %p419 = pneg %p258
        %p420 = pneg %p255
        %p421 = pneg %p279
        %p422 = pneg %p276
        %p423 = pneg %p300
        %p424 = pneg %p297
        %p425 = pneg %p326
        %p426 = pneg %p323
        %s427 = sand.u32 %s313, 1
        %s428 = scalar_lea.sflag [#allocation3], %s427
        %s429 = sand.u32 %s313, 1
        %s430 = smul.addr %s429, 8
        %s431 = scalar_lea.vmem [#allocation2], %s430
        %p432 = scmp.lt.s32.totalorder %s27, 1
        %s433 = scalar_select %p432, %s27, 1
        %s434 = smul.addr %s433, 8
        %s435 = scalar_lea.vmem %s0, %s434
        %v436 = vld [vmem:[%s435] sm:$0xff]
        %v437 = vld [vmem:[%s1] sm:$0xff]
        %v438 = vld [vmem:[%s1 + $0x8] sm:$0xff]
        %v439 = vld [vmem:[%s1 + $0x10] sm:$0xff]
        %v440 = vld [vmem:[%s1 + $0x18] sm:$0xff]
        %v441 = vld [vmem:[%s2] sm:$0x1]
        %v443 = vlaneseq
        %v444 = vshrl.u32 %v443, 7
        %v445 = vsub.s32 0, %v444
        %v446 = vrot.slane %v441, %v445
        %vm448 = vcmask 261120
        %v450 = vsel %vm448, %v436, 0
        %452 = vmatprep.subr.mxu0 0.0
        %453 = vmatpush1.msra.mxu0 %v437
        %454 = vmatprep.subr.mxu0 0.0
        %455 = vmatpush1.msra.mxu0 %v438
        %456 = vmatprep.subr.mxu0 0.0
        %457 = vmatpush1.msra.mxu0 %v439
        %458 = vmatprep.subr.mxu0 0.0
        %459 = vmatpush1.msra.mxu0 %v440
        %460 = vmatprep.subr.mxu0 0.0
        %461 = vmatpush1.msra.mxu0 0.0
        %462 = vmatprep.subr.mxu0 0.0
        %463 = vmatpush1.msra.mxu0 0.0
        %464 = vmatprep.subr.mxu0 0.0
        %465 = vmatpush1.msra.mxu0 0.0
        %466 = vmatprep.subr.mxu0 0.0
        %467 = vmatpush1.msra.mxu0 0.0
        %468 = vmatprep.subr.mxu0 0.0
        %469 = vmatpush1.msra.mxu0 0.0
        %470 = vmatprep.subr.mxu0 0.0
        %471 = vmatpush1.msra.mxu0 0.0
        %472 = vmatprep.subr.mxu0 0.0
        %473 = vmatpush1.msra.mxu0 0.0
        %474 = vmatprep.subr.mxu0 0.0
        %475 = vmatpush1.msra.mxu0 0.0
        %476 = vmatprep.subr.mxu0 0.0
        %477 = vmatpush1.msra.mxu0 0.0
        %478 = vmatprep.subr.mxu0 0.0
        %479 = vmatpush1.msra.mxu0 0.0
        %480 = vmatprep.subr.mxu0 0.0
        %481 = vmatpush1.msra.mxu0 0.0
        %482 = vmatprep.subr.mxu0 0.0
        %483 = vmatpush1.msra.mxu0 0.0
        %484 = vmatprep.subr.mxu0 0.0
        %485 = vmatpush1.msra.mxu0 0.0
        %486 = vmatprep.subr.mxu0 0.0
        %487 = vmatpush1.msra.mxu0 0.0
        %488 = vmatprep.subr.mxu0 0.0
        %489 = vmatpush1.msra.mxu0 0.0
        %490 = vmatprep.subr.mxu0 0.0
        %491 = vmatpush1.msra.mxu0 0.0
        %492 = vmatprep.subr.mxu0 0.0
        %493 = vmatpush1.msra.mxu0 0.0
        %494 = vmatprep.subr.mxu0 0.0
        %495 = vmatpush1.msra.mxu0 0.0
        %496 = vmatprep.subr.mxu0 0.0
        %497 = vmatpush1.msra.mxu0 0.0
        %498 = vmatprep.subr.mxu0 0.0
        %499 = vmatpush1.msra.mxu0 0.0
        %500 = vmatprep.subr.mxu0 0.0
        %501 = vmatpush1.msra.mxu0 0.0
        %502 = vmatprep.subr.mxu0 0.0
        %503 = vmatpush1.msra.mxu0 0.0
        %504 = vmatprep.subr.mxu0 0.0
        %505 = vmatpush1.msra.mxu0 0.0
        %506 = vmatprep.subr.mxu0 0.0
        %507 = vmatpush1.msra.mxu0 0.0
        %508 = vmatprep.subr.mxu0 0.0
        %509 = vmatpush1.msra.mxu0 0.0
        %510 = vmatprep.subr.mxu0 0.0
        %511 = vmatpush1.msra.mxu0 0.0
        %512 = vmatprep.subr.mxu0 0.0
        %513 = vmatpush1.msra.mxu0 0.0
        %514 = vmatprep.subr.mxu0 0.0
        %515 = vmatpush1.msra.mxu0 0.0
        %516 = vmatprep.mubr.f32.mxu0 0.0
        %517 = vmatmul.mubr.f32.gmra.mrb[0].mxu0 %v450
        %v518 = vpop.f32.mrb[0].mxu0
        %v519 = vadd.f32 %v446, %v518
        %v520 = vpop.f32.mrb[0].mxu0
        %521 = vdwg.mxu0
        %v522 = vmax.f32 %v519, 0.0
        %v523 = vld [vmem:[%s3] sm:$0xff]
        %v524 = vld [vmem:[%s3 + $0x8] sm:$0xff]
        %v525 = vld [vmem:[%s3 + $0x10] sm:$0xff]
        %v526 = vld [vmem:[%s3 + $0x18] sm:$0xff]
        %v527 = vld [vmem:[%s3 + $0x20] sm:$0xff]
        %v528 = vld [vmem:[%s3 + $0x28] sm:$0xff]
        %v529 = vld [vmem:[%s3 + $0x30] sm:$0xff]
        %v530 = vld [vmem:[%s3 + $0x38] sm:$0xff]
        %v531 = vld [vmem:[%s3 + $0x40] sm:$0xff]
        %v532 = vld [vmem:[%s3 + $0x48] sm:$0xff]
        %v533 = vld [vmem:[%s3 + $0x50] sm:$0xff]
        %v534 = vld [vmem:[%s3 + $0x58] sm:$0xff]
        %v535 = vld [vmem:[%s3 + $0x60] sm:$0xff]
        %v536 = vld [vmem:[%s3 + $0x68] sm:$0xff]
        %v537 = vld [vmem:[%s3 + $0x70] sm:$0xff]
        %v538 = vld [vmem:[%s3 + $0x78] sm:$0xff]
        %v539 = vld [vmem:[%s4] sm:$0x1]
        %v541 = vlaneseq
        %v542 = vshrl.u32 %v541, 7
        %v543 = vsub.s32 0, %v542
        %v544 = vrot.slane %v539, %v543
        %546 = vmatprep.subr.mxu0 0.0
        %547 = vmatpush1.msra.mxu0 %v523
        %548 = vmatprep.subr.mxu0 0.0
        %549 = vmatpush1.msra.mxu0 %v524
        %550 = vmatprep.subr.mxu0 0.0
        %551 = vmatpush1.msra.mxu0 %v525
        %552 = vmatprep.subr.mxu0 0.0
        %553 = vmatpush1.msra.mxu0 %v526
        %554 = vmatprep.subr.mxu0 0.0
        %555 = vmatpush1.msra.mxu0 %v527
        %556 = vmatprep.subr.mxu0 0.0
        %557 = vmatpush1.msra.mxu0 %v528
        %558 = vmatprep.subr.mxu0 0.0
        %559 = vmatpush1.msra.mxu0 %v529
        %560 = vmatprep.subr.mxu0 0.0
        %561 = vmatpush1.msra.mxu0 %v530
        %562 = vmatprep.subr.mxu0 0.0
        %563 = vmatpush1.msra.mxu0 %v531
        %564 = vmatprep.subr.mxu0 0.0
        %565 = vmatpush1.msra.mxu0 %v532
        %566 = vmatprep.subr.mxu0 0.0
        %567 = vmatpush1.msra.mxu0 %v533
        %568 = vmatprep.subr.mxu0 0.0
        %569 = vmatpush1.msra.mxu0 %v534
        %570 = vmatprep.subr.mxu0 0.0
        %571 = vmatpush1.msra.mxu0 %v535
        %572 = vmatprep.subr.mxu0 0.0
        %573 = vmatpush1.msra.mxu0 %v536
        %574 = vmatprep.subr.mxu0 0.0
        %575 = vmatpush1.msra.mxu0 %v537
        %576 = vmatprep.subr.mxu0 0.0
        %577 = vmatpush1.msra.mxu0 %v538
        %578 = vmatprep.subr.mxu0 0.0
        %579 = vmatpush1.msra.mxu0 0.0
        %580 = vmatprep.subr.mxu0 0.0
        %581 = vmatpush1.msra.mxu0 0.0
        %582 = vmatprep.subr.mxu0 0.0
        %583 = vmatpush1.msra.mxu0 0.0
        %584 = vmatprep.subr.mxu0 0.0
        %585 = vmatpush1.msra.mxu0 0.0
        %586 = vmatprep.subr.mxu0 0.0
        %587 = vmatpush1.msra.mxu0 0.0
        %588 = vmatprep.subr.mxu0 0.0
        %589 = vmatpush1.msra.mxu0 0.0
        %590 = vmatprep.subr.mxu0 0.0
        %591 = vmatpush1.msra.mxu0 0.0
        %592 = vmatprep.subr.mxu0 0.0
        %593 = vmatpush1.msra.mxu0 0.0
        %594 = vmatprep.subr.mxu0 0.0
        %595 = vmatpush1.msra.mxu0 0.0
        %596 = vmatprep.subr.mxu0 0.0
        %597 = vmatpush1.msra.mxu0 0.0
        %598 = vmatprep.subr.mxu0 0.0
        %599 = vmatpush1.msra.mxu0 0.0
        %600 = vmatprep.subr.mxu0 0.0
        %601 = vmatpush1.msra.mxu0 0.0
        %602 = vmatprep.subr.mxu0 0.0
        %603 = vmatpush1.msra.mxu0 0.0
        %604 = vmatprep.subr.mxu0 0.0
        %605 = vmatpush1.msra.mxu0 0.0
        %606 = vmatprep.subr.mxu0 0.0
        %607 = vmatpush1.msra.mxu0 0.0
        %608 = vmatprep.subr.mxu0 0.0
        %609 = vmatpush1.msra.mxu0 0.0
        %610 = vmatprep.mubr.f32.mxu0 0.0
        %611 = vmatmul.mubr.f32.gmra.mrb[0].mxu0 %v522
        %v612 = vpop.f32.mrb[0].mxu0
        %v613 = vadd.f32 %v544, %v612
        %v614 = vpop.f32.mrb[0].mxu0
        %615 = vdwg.mxu0
        %v616 = vmax.f32 %v613, 0.0
        %v617 = vld [vmem:[%s5] sm:$0xff]
        %v618 = vld [vmem:[%s5 + $0x8] sm:$0xff]
        %v619 = vld [vmem:[%s5 + $0x10] sm:$0xff]
        %v620 = vld [vmem:[%s5 + $0x18] sm:$0xff]
        %v621 = vld [vmem:[%s5 + $0x20] sm:$0xff]
        %v622 = vld [vmem:[%s5 + $0x28] sm:$0xff]
        %v623 = vld [vmem:[%s5 + $0x30] sm:$0xff]
        %v624 = vld [vmem:[%s5 + $0x38] sm:$0xff]
        %v625 = vld [vmem:[%s6] sm:$0x1]
        %v627 = vlaneseq
        %v628 = vshrl.u32 %v627, 7
        %v629 = vsub.s32 0, %v628
        %v630 = vrot.slane %v625, %v629
        %vm632 = vcmask 523264
        %v634 = vsel %vm632, %v616, 0
        %636 = vmatprep.subr.mxu0 0.0
        %637 = vmatpush1.msra.mxu0 %v617
        %638 = vmatprep.subr.mxu0 0.0
        %639 = vmatpush1.msra.mxu0 %v618
        %640 = vmatprep.subr.mxu0 0.0
        %641 = vmatpush1.msra.mxu0 %v619
        %642 = vmatprep.subr.mxu0 0.0
        %643 = vmatpush1.msra.mxu0 %v620
        %644 = vmatprep.subr.mxu0 0.0
        %645 = vmatpush1.msra.mxu0 %v621
        %646 = vmatprep.subr.mxu0 0.0
        %647 = vmatpush1.msra.mxu0 %v622
        %648 = vmatprep.subr.mxu0 0.0
        %649 = vmatpush1.msra.mxu0 %v623
        %650 = vmatprep.subr.mxu0 0.0
        %651 = vmatpush1.msra.mxu0 %v624
        %652 = vmatprep.subr.mxu0 0.0
        %653 = vmatpush1.msra.mxu0 0.0
        %654 = vmatprep.subr.mxu0 0.0
        %655 = vmatpush1.msra.mxu0 0.0
        %656 = vmatprep.subr.mxu0 0.0
        %657 = vmatpush1.msra.mxu0 0.0
        %658 = vmatprep.subr.mxu0 0.0
        %659 = vmatpush1.msra.mxu0 0.0
        %660 = vmatprep.subr.mxu0 0.0
        %661 = vmatpush1.msra.mxu0 0.0
        %662 = vmatprep.subr.mxu0 0.0
        %663 = vmatpush1.msra.mxu0 0.0
        %664 = vmatprep.subr.mxu0 0.0
        %665 = vmatpush1.msra.mxu0 0.0
        %666 = vmatprep.subr.mxu0 0.0
        %667 = vmatpush1.msra.mxu0 0.0
        %668 = vmatprep.subr.mxu0 0.0
        %669 = vmatpush1.msra.mxu0 0.0
        %670 = vmatprep.subr.mxu0 0.0
        %671 = vmatpush1.msra.mxu0 0.0
        %672 = vmatprep.subr.mxu0 0.0
        %673 = vmatpush1.msra.mxu0 0.0
        %674 = vmatprep.subr.mxu0 0.0
        %675 = vmatpush1.msra.mxu0 0.0
        %676 = vmatprep.subr.mxu0 0.0
        %677 = vmatpush1.msra.mxu0 0.0
        %678 = vmatprep.subr.mxu0 0.0
        %679 = vmatpush1.msra.mxu0 0.0
        %680 = vmatprep.subr.mxu0 0.0
        %681 = vmatpush1.msra.mxu0 0.0
        %682 = vmatprep.subr.mxu0 0.0
        %683 = vmatpush1.msra.mxu0 0.0
        %684 = vmatprep.subr.mxu0 0.0
        %685 = vmatpush1.msra.mxu0 0.0
        %686 = vmatprep.subr.mxu0 0.0
        %687 = vmatpush1.msra.mxu0 0.0
        %688 = vmatprep.subr.mxu0 0.0
        %689 = vmatpush1.msra.mxu0 0.0
        %690 = vmatprep.subr.mxu0 0.0
        %691 = vmatpush1.msra.mxu0 0.0
        %692 = vmatprep.subr.mxu0 0.0
        %693 = vmatpush1.msra.mxu0 0.0
        %694 = vmatprep.subr.mxu0 0.0
        %695 = vmatpush1.msra.mxu0 0.0
        %696 = vmatprep.subr.mxu0 0.0
        %697 = vmatpush1.msra.mxu0 0.0
        %698 = vmatprep.subr.mxu0 0.0
        %699 = vmatpush1.msra.mxu0 0.0
        %700 = vmatprep.mubr.f32.mxu0 0.0
        %701 = vmatmul.mubr.f32.gmra.mrb[0].mxu0 %v634
        %v702 = vpop.f32.mrb[0].mxu0
        %v703 = vadd.f32 %v630, %v702
        %v704 = vpop.f32.mrb[0].mxu0
        %705 = vdwg.mxu0
        %v706 = vmax.f32 %v703, 0.0
        %v707 = vld [vmem:[%s7] sm:$0xff]
        %v708 = vld [vmem:[%s7 + $0x8] sm:$0x3]
        %v709 = vld [vmem:[%s8] sm:$0x1]
        %v711 = vlaneseq
        %v712 = vshrl.u32 %v711, 7
        %v713 = vsub.s32 0, %v712
        %v714 = vrot.slane %v709, %v713
        %vm716 = vcmask 80896
        %v718 = vsel %vm716, %v706, 0
        %vm720 = vcmask 1041408
        %v722 = vsel %vm720, %v708, 0
        %724 = vmatprep.subr.mxu0 0.0
        %725 = vmatpush1.msra.mxu0 %v707
        %726 = vmatprep.subr.mxu0 0.0
        %727 = vmatpush1.msra.mxu0 %v722
        %728 = vmatprep.subr.mxu0 0.0
        %729 = vmatpush1.msra.mxu0 0.0
        %730 = vmatprep.subr.mxu0 0.0
        %731 = vmatpush1.msra.mxu0 0.0
        %732 = vmatprep.subr.mxu0 0.0
        %733 = vmatpush1.msra.mxu0 0.0
        %734 = vmatprep.subr.mxu0 0.0
        %735 = vmatpush1.msra.mxu0 0.0
        %736 = vmatprep.subr.mxu0 0.0
        %737 = vmatpush1.msra.mxu0 0.0
        %738 = vmatprep.subr.mxu0 0.0
        %739 = vmatpush1.msra.mxu0 0.0
        %740 = vmatprep.subr.mxu0 0.0
        %741 = vmatpush1.msra.mxu0 0.0
        %742 = vmatprep.subr.mxu0 0.0
        %743 = vmatpush1.msra.mxu0 0.0
        %744 = vmatprep.subr.mxu0 0.0
        %745 = vmatpush1.msra.mxu0 0.0
        %746 = vmatprep.subr.mxu0 0.0
        %747 = vmatpush1.msra.mxu0 0.0
        %748 = vmatprep.subr.mxu0 0.0
        %749 = vmatpush1.msra.mxu0 0.0
        %750 = vmatprep.subr.mxu0 0.0
        %751 = vmatpush1.msra.mxu0 0.0
        %752 = vmatprep.subr.mxu0 0.0
        %753 = vmatpush1.msra.mxu0 0.0
        %754 = vmatprep.subr.mxu0 0.0
        %755 = vmatpush1.msra.mxu0 0.0
        %756 = vmatprep.subr.mxu0 0.0
        %757 = vmatpush1.msra.mxu0 0.0
        %758 = vmatprep.subr.mxu0 0.0
        %759 = vmatpush1.msra.mxu0 0.0
        %760 = vmatprep.subr.mxu0 0.0
        %761 = vmatpush1.msra.mxu0 0.0
        %762 = vmatprep.subr.mxu0 0.0
        %763 = vmatpush1.msra.mxu0 0.0
        %764 = vmatprep.subr.mxu0 0.0
        %765 = vmatpush1.msra.mxu0 0.0
        %766 = vmatprep.subr.mxu0 0.0
        %767 = vmatpush1.msra.mxu0 0.0
        %768 = vmatprep.subr.mxu0 0.0
        %769 = vmatpush1.msra.mxu0 0.0
        %770 = vmatprep.subr.mxu0 0.0
        %771 = vmatpush1.msra.mxu0 0.0
        %772 = vmatprep.subr.mxu0 0.0
        %773 = vmatpush1.msra.mxu0 0.0
        %774 = vmatprep.subr.mxu0 0.0
        %775 = vmatpush1.msra.mxu0 0.0
        %776 = vmatprep.subr.mxu0 0.0
        %777 = vmatpush1.msra.mxu0 0.0
        %778 = vmatprep.subr.mxu0 0.0
        %779 = vmatpush1.msra.mxu0 0.0
        %780 = vmatprep.subr.mxu0 0.0
        %781 = vmatpush1.msra.mxu0 0.0
        %782 = vmatprep.subr.mxu0 0.0
        %783 = vmatpush1.msra.mxu0 0.0
        %784 = vmatprep.subr.mxu0 0.0
        %785 = vmatpush1.msra.mxu0 0.0
        %786 = vmatprep.subr.mxu0 0.0
        %787 = vmatpush1.msra.mxu0 0.0
        %788 = vmatprep.mubr.f32.mxu0 0.0
        %789 = vmatmul.mubr.f32.gmra.mrb[0].mxu0 %v718
        %v790 = vpop.f32.mrb[0].mxu0
        %v791 = vadd.f32 %v714, %v790
        %v792 = vpop.f32.mrb[0].mxu0
        %793 = vdwg.mxu0
        %v794 = vmax.f32 %v791, 0.0
        %v795 = vld [vmem:[%s9] sm:$0xff]
        %v796 = vld [vmem:[%s9 + $0x8] sm:$0x3]
        %v797 = vld [vmem:[%s10] sm:$0x1]
        %v799 = vlaneseq
        %v800 = vshrl.u32 %v799, 7
        %v801 = vsub.s32 0, %v800
        %v802 = vrot.slane %v797, %v801
        %v805 = vsel %vm716, %v794, 0
        %v808 = vsel %vm720, %v796, 0
        %810 = vmatprep.subr.mxu0 0.0
        %811 = vmatpush1.msra.mxu0 %v795
        %812 = vmatprep.subr.mxu0 0.0
        %813 = vmatpush1.msra.mxu0 %v808
        %814 = vmatprep.subr.mxu0 0.0
        %815 = vmatpush1.msra.mxu0 0.0
        %816 = vmatprep.subr.mxu0 0.0
        %817 = vmatpush1.msra.mxu0 0.0
        %818 = vmatprep.subr.mxu0 0.0
        %819 = vmatpush1.msra.mxu0 0.0
        %820 = vmatprep.subr.mxu0 0.0
        %821 = vmatpush1.msra.mxu0 0.0
        %822 = vmatprep.subr.mxu0 0.0
        %823 = vmatpush1.msra.mxu0 0.0
        %824 = vmatprep.subr.mxu0 0.0
        %825 = vmatpush1.msra.mxu0 0.0
        %826 = vmatprep.subr.mxu0 0.0
        %827 = vmatpush1.msra.mxu0 0.0
        %828 = vmatprep.subr.mxu0 0.0
        %829 = vmatpush1.msra.mxu0 0.0
        %830 = vmatprep.subr.mxu0 0.0
        %831 = vmatpush1.msra.mxu0 0.0
        %832 = vmatprep.subr.mxu0 0.0
        %833 = vmatpush1.msra.mxu0 0.0
        %834 = vmatprep.subr.mxu0 0.0
        %835 = vmatpush1.msra.mxu0 0.0
        %836 = vmatprep.subr.mxu0 0.0
        %837 = vmatpush1.msra.mxu0 0.0
        %838 = vmatprep.subr.mxu0 0.0
        %839 = vmatpush1.msra.mxu0 0.0
        %840 = vmatprep.subr.mxu0 0.0
        %841 = vmatpush1.msra.mxu0 0.0
        %842 = vmatprep.subr.mxu0 0.0
        %843 = vmatpush1.msra.mxu0 0.0
        %844 = vmatprep.subr.mxu0 0.0
        %845 = vmatpush1.msra.mxu0 0.0
        %846 = vmatprep.subr.mxu0 0.0
        %847 = vmatpush1.msra.mxu0 0.0
        %848 = vmatprep.subr.mxu0 0.0
        %849 = vmatpush1.msra.mxu0 0.0
        %850 = vmatprep.subr.mxu0 0.0
        %851 = vmatpush1.msra.mxu0 0.0
        %852 = vmatprep.subr.mxu0 0.0
        %853 = vmatpush1.msra.mxu0 0.0
        %854 = vmatprep.subr.mxu0 0.0
        %855 = vmatpush1.msra.mxu0 0.0
        %856 = vmatprep.subr.mxu0 0.0
        %857 = vmatpush1.msra.mxu0 0.0
        %858 = vmatprep.subr.mxu0 0.0
        %859 = vmatpush1.msra.mxu0 0.0
        %860 = vmatprep.subr.mxu0 0.0
        %861 = vmatpush1.msra.mxu0 0.0
        %862 = vmatprep.subr.mxu0 0.0
        %863 = vmatpush1.msra.mxu0 0.0
        %864 = vmatprep.subr.mxu0 0.0
        %865 = vmatpush1.msra.mxu0 0.0
        %866 = vmatprep.subr.mxu0 0.0
        %867 = vmatpush1.msra.mxu0 0.0
        %868 = vmatprep.subr.mxu0 0.0
        %869 = vmatpush1.msra.mxu0 0.0
        %870 = vmatprep.subr.mxu0 0.0
        %871 = vmatpush1.msra.mxu0 0.0
        %872 = vmatprep.subr.mxu0 0.0
        %873 = vmatpush1.msra.mxu0 0.0
        %874 = vmatprep.mubr.f32.mxu0 0.0
        %875 = vmatmul.mubr.f32.gmra.mrb[0].mxu0 %v805
        %v876 = vpop.f32.mrb[0].mxu0
        %v877 = vadd.f32 %v802, %v876
        %v878 = vpop.f32.mrb[0].mxu0
        %879 = vdwg.mxu0
        %v880 = vmax.f32 %v877, 0.0
        %v881 = vld [vmem:[%s11] sm:$0xff]
        %v882 = vld [vmem:[%s11 + $0x8] sm:$0x3]
        %v883 = vld [vmem:[%s12] sm:$0x1]
        %v885 = vlaneseq
        %v886 = vshrl.u32 %v885, 7
        %v887 = vsub.s32 0, %v886
        %v888 = vrot.slane %v883, %v887
        %v891 = vsel %vm716, %v880, 0
        %v894 = vsel %vm720, %v882, 0
        %896 = vmatprep.subr.mxu0 0.0
        %897 = vmatpush1.msra.mxu0 %v881
        %898 = vmatprep.subr.mxu0 0.0
        %899 = vmatpush1.msra.mxu0 %v894
        %900 = vmatprep.subr.mxu0 0.0
        %901 = vmatpush1.msra.mxu0 0.0
        %902 = vmatprep.subr.mxu0 0.0
        %903 = vmatpush1.msra.mxu0 0.0
        %904 = vmatprep.subr.mxu0 0.0
        %905 = vmatpush1.msra.mxu0 0.0
        %906 = vmatprep.subr.mxu0 0.0
        %907 = vmatpush1.msra.mxu0 0.0
        %908 = vmatprep.subr.mxu0 0.0
        %909 = vmatpush1.msra.mxu0 0.0
        %910 = vmatprep.subr.mxu0 0.0
        %911 = vmatpush1.msra.mxu0 0.0
        %912 = vmatprep.subr.mxu0 0.0
        %913 = vmatpush1.msra.mxu0 0.0
        %914 = vmatprep.subr.mxu0 0.0
        %915 = vmatpush1.msra.mxu0 0.0
        %916 = vmatprep.subr.mxu0 0.0
        %917 = vmatpush1.msra.mxu0 0.0
        %918 = vmatprep.subr.mxu0 0.0
        %919 = vmatpush1.msra.mxu0 0.0
        %920 = vmatprep.subr.mxu0 0.0
        %921 = vmatpush1.msra.mxu0 0.0
        %922 = vmatprep.subr.mxu0 0.0
        %923 = vmatpush1.msra.mxu0 0.0
        %924 = vmatprep.subr.mxu0 0.0
        %925 = vmatpush1.msra.mxu0 0.0
        %926 = vmatprep.subr.mxu0 0.0
        %927 = vmatpush1.msra.mxu0 0.0
        %928 = vmatprep.subr.mxu0 0.0
        %929 = vmatpush1.msra.mxu0 0.0
        %930 = vmatprep.subr.mxu0 0.0
        %931 = vmatpush1.msra.mxu0 0.0
        %932 = vmatprep.subr.mxu0 0.0
        %933 = vmatpush1.msra.mxu0 0.0
        %934 = vmatprep.subr.mxu0 0.0
        %935 = vmatpush1.msra.mxu0 0.0
        %936 = vmatprep.subr.mxu0 0.0
        %937 = vmatpush1.msra.mxu0 0.0
        %938 = vmatprep.subr.mxu0 0.0
        %939 = vmatpush1.msra.mxu0 0.0
        %940 = vmatprep.subr.mxu0 0.0
        %941 = vmatpush1.msra.mxu0 0.0
        %942 = vmatprep.subr.mxu0 0.0
        %943 = vmatpush1.msra.mxu0 0.0
        %944 = vmatprep.subr.mxu0 0.0
        %945 = vmatpush1.msra.mxu0 0.0
        %946 = vmatprep.subr.mxu0 0.0
        %947 = vmatpush1.msra.mxu0 0.0
        %948 = vmatprep.subr.mxu0 0.0
        %949 = vmatpush1.msra.mxu0 0.0
        %950 = vmatprep.subr.mxu0 0.0
        %951 = vmatpush1.msra.mxu0 0.0
        %952 = vmatprep.subr.mxu0 0.0
        %953 = vmatpush1.msra.mxu0 0.0
        %954 = vmatprep.subr.mxu0 0.0
        %955 = vmatpush1.msra.mxu0 0.0
        %956 = vmatprep.subr.mxu0 0.0
        %957 = vmatpush1.msra.mxu0 0.0
        %958 = vmatprep.subr.mxu0 0.0
        %959 = vmatpush1.msra.mxu0 0.0
        %960 = vmatprep.mubr.f32.mxu0 0.0
        %961 = vmatmul.mubr.f32.gmra.mrb[0].mxu0 %v891
        %v962 = vpop.f32.mrb[0].mxu0
        %v963 = vadd.f32 %v888, %v962
        %v964 = vpop.f32.mrb[0].mxu0
        %965 = vdwg.mxu0
        %v966 = vmax.f32 %v963, 0.0
        %v967 = vsel %vm716, %v966, -inf
        %968 = vmax.xlane.f32.xlu0 %v967
        %v969 = vpop.xlane.xlu0 %968
        %v970 = vsub.f32 %v966, %v969
        %v971 = vmul.f32 %v970, 1.442695
        %v972 = vpow.pop %v971
        %v973 = vsel %vm716, %v972, 0.0
        %974 = vadd.xlane.f32.xlu0 %v973
        %v975 = vpop.xlane.xlu0 %974
        %v976 = vlog2.pop %v975
        %v977 = vmul.f32 %v976, 0.6931472
        %v978 = vsub.f32 %v970, %v977
        %979 = vst.msk [vmem:[%s431] sm:$0xff] %vm716, %v978
        %s980 = sand.u32 %s313, 1
        %s981 = scalar_lea.sflag [#allocation3], %s980
        %s982 = sand.u32 %s313, 1
        %s983 = smul.addr %s982, 8
        %s984 = scalar_lea.vmem [#allocation2], %s983
        // Predicated region
        $region73: #{tpu_custom_call.1} parent=71 // pred_check
          %p985 = pneg %p323
        $region74: #{tpu_custom_call.1} parent=71 // pred_check_branch
          %987 = sbr.rel (%p985) target = $region76
        $region75: #{tpu_custom_call.1} parent=71 // pred_region
          %s989 = ssub.s32 128, 128
          %990 = vsyncadd %s981, %s989
          %s991 = smul.addr %s27, 128
          %s992 = scalar_lea.hbm %s13, %s991
          %s994 = sshll.u32 %s984, 4
          %s995 = int_to_ptr.vmem [resolvable:$true] %s994
          %997 = dma.vmem_to_hbm [thread:$0]  %s995, 128, %s992, %s981
        $region76: #{tpu_custom_call.1} parent=71 // pred_fallthru
          _
      $region72: #{tpu_custom_call.1} parent=5 // pred_fallthru
        _
      %p998 = scmp.le.s32.totalorder 2, %s22
      // Predicated region
      $region77: #{tpu_custom_call.1} parent=5 // pred_check
        %p999 = pneg %p998
      $region78: #{tpu_custom_call.1} parent=5 // pred_check_branch
        %1001 = sbr.rel (%p999) target = $region80
      $region79: #{tpu_custom_call.1} parent=5 // pred_region
        %s1002 = ssub.s32 %s22, 2
        // Predicated region
        $region81: #{tpu_custom_call.1} parent=79 // pred_check
          %p1003 = pneg %p329
        $region82: #{tpu_custom_call.1} parent=79 // pred_check_branch
          %1005 = sbr.rel (%p1003) target = $region84
        $region83: #{tpu_custom_call.1} parent=79 // pred_region
          %s1006 = sand.u32 %s314, 1
          %s1007 = scalar_lea.sflag [#allocation3], %s1006
          %s1008 = sand.u32 %s314, 1
          %s1009 = smul.addr %s1008, 8
          %s1010 = scalar_lea.vmem [#allocation2], %s1009
          %1011 = dma.done %s1007, 128
        $region84: #{tpu_custom_call.1} parent=79 // pred_fallthru
          _
      $region80: #{tpu_custom_call.1} parent=5 // pred_fallthru
        _
    $region6: #{tpu_custom_call.1} parent=1 // loop_footer
      %s26 = sadd.s32 1, %s22
    $region7: #{tpu_custom_call.1} parent=1 // loop_footer_branch
      %21 = sbr.rel target = $region3
    $region8: #{tpu_custom_call.1} parent=1 // loop_exit
      _
    %1012 = vsyncpa [#allocation3], 1
    %s1013 = scalar_lea.sflag [#allocation3], 1
    %1014 = vsyncpa %s1013, 1

</llo_original>
